<compile_context>
chip_gen: v6e
topology: v6e:2x2x1
jax: 0.10.0
libtpu: 0.0.40
codegen_flags: <defaults>
</compile_context>

<pallas_src>
import functools

import jax
import jax.numpy as jnp
from jax import lax
from jax.experimental import pallas as pl
from jax.experimental.pallas import tpu as pltpu

_LANE = 128
_SUBLANE = 8
_MIB = 1024 * 1024


def _round_up(x, m):
    return ((x + m - 1) // m) * m


def _vmem_limit_bytes():
    """Per-generation scoped-VMEM limit (set explicitly; defaults are small)."""
    try:
        cap = pltpu.get_tpu_info().vmem_capacity_bytes
    except Exception:
        cap = 128 * _MIB
    if cap <= 64 * _MIB:          # v7x: 64 MiB physical per TensorCore
        return 48 * _MIB
    return 64 * _MIB              # v5e / v6e: 128 MiB physical


def _fold_factor(H, W):
    """Smallest k dividing H with k*W >= 128, so folded rows are lane-dense."""
    if W >= _LANE or H <= 1:
        return 1
    for k in range(2, H + 1):
        if H % k == 0 and k * W >= _LANE:
            return k
    return 1


def _choose_tiles(N, C, H, W, in_itemsize, out_itemsize, budget):
    """Pick (TC, TH, TW).

    TW is a multiple of 128 or == W; TH is a multiple of 8 or == H; TC == C
    unless even a minimal (8, 128) spatial tile with all channels resident
    would blow the budget, in which case channels are chunked.
    """
    def per_elem(tc):
        # 2 inputs x 2 pipeline buffers + 2 output buffers + f32 accumulator,
        # in bytes per spatial element of a block.
        return 4 * tc * in_itemsize + 2 * out_itemsize + 4

    min_tile = _SUBLANE * _LANE
    if per_elem(C) * min_tile <= budget:
        TC = C
    else:
        TC = max(1, (budget // min_tile - 2 * out_itemsize - 4) // (4 * in_itemsize))

    max_elems = max(min_tile, budget // per_elem(TC))

    if H * W <= max_elems:
        TH, TW = H, W
        # Megacore (v7x): guarantee >= 2 parallel grid steps when possible.
        if N == 1:
            if H > _SUBLANE:
                TH = _round_up(-(-H // 2), _SUBLANE)
            elif W >= 2 * _LANE:
                TW = _round_up(-(-W // 2), _LANE)
        return TC, TH, TW

    # Spatial tiling: grow TW (contiguous lane axis) toward full rows first.
    max_tw = max_elems // _SUBLANE
    if max_tw >= W:
        TW = W
    else:
        TW = max(_LANE, (max_tw // _LANE) * _LANE)
    max_th = max_elems // TW
    TH = min(max(_SUBLANE, (max_th // _SUBLANE) * _SUBLANE), H)
    return TC, TH, TW


def _disteuc_kernel(ref_ref, tar_ref, o_ref, acc_ref, *,
                    gamma, gamma_bias, c_total, c_block):
    # ref_ref / tar_ref : VMEM (1, c_block, TH, TW), input dtype
    # o_ref             : VMEM (1, TH, TW), output dtype
    # acc_ref           : VMEM (TH, TW) f32 scratch (persists across the grid)
    kc = pl.program_id(3)

    @pl.when(kc == 0)
    def _init():
        acc_ref[...] = jnp.zeros_like(acc_ref)

    def sq_diff(c):
        d = (tar_ref[0, c, :, :].astype(jnp.float32)
             - ref_ref[0, c, :, :].astype(jnp.float32))
        return d * d

    acc = acc_ref[...]
    if c_block >= c_total:
        # Whole channel axis resident in this block (the common case).
        if c_total <= 16:
            for c in range(c_total):               # static unroll: VALU adds
                acc = acc + sq_diff(c)
        else:
            acc = lax.fori_loop(0, c_total,
                                lambda c, a: a + sq_diff(c), acc, unroll=4)
    else:
        # Channel-chunked reduction; only the valid channels of the (possibly
        # OOB-padded) last chunk are read.
        c_valid = jnp.minimum(c_block, c_total - kc * c_block)
        acc = lax.fori_loop(0, c_valid, lambda c, a: a + sq_diff(c), acc)
    acc_ref[...] = acc

    @pl.when(kc == pl.num_programs(3) - 1)
    def _finalize():
        dist = jnp.sqrt(acc_ref[...])
        o_ref[0, :, :] = jax.nn.sigmoid(gamma * dist + gamma_bias).astype(o_ref.dtype)


def dist_euc_forward(ref_tensor, tar_tensor, combination_bias,
                     gamma_sigmoid=10.0, block_budget_bytes=None):
    """Pallas implementation of DistEucModule.forward.

    ref_tensor, tar_tensor: (N, C, H, W) float arrays (NCHW, as in PyTorch).
    combination_bias: python float / 0-d scalar (the learned parameter; it is
      folded into a compile-time constant together with gamma).
    Returns (N, H, W) in the promoted input dtype.
    """
    assert ref_tensor.ndim == 4 and tar_tensor.shape == ref_tensor.shape
    N, C, H, W = ref_tensor.shape

    out_dtype = jnp.result_type(ref_tensor.dtype, tar_tensor.dtype)
    in_itemsize = max(jnp.dtype(ref_tensor.dtype).itemsize,
                      jnp.dtype(tar_tensor.dtype).itemsize)
    out_itemsize = jnp.dtype(out_dtype).itemsize

    # Lane-density fold for narrow images: (H, W) -> (H//k, k*W).  A pure
    # reshape of the two contiguous minor dims; legal because the op is
    # elementwise over the spatial plane.
    k = _fold_factor(H, W)
    Hf, Wf = H // k, W * k
    refp = ref_tensor.reshape(N, C, Hf, Wf) if k > 1 else ref_tensor
    tarp = tar_tensor.reshape(N, C, Hf, Wf) if k > 1 else tar_tensor

    vmem_limit = _vmem_limit_bytes()
    budget = (vmem_limit * 3) // 4 if block_budget_bytes is None else block_budget_bytes
    TC, TH, TW = _choose_tiles(N, C, Hf, Wf, in_itemsize, out_itemsize, budget)

    grid = (N, pl.cdiv(Hf, TH), pl.cdiv(Wf, TW), pl.cdiv(C, TC))

    gamma = float(gamma_sigmoid)
    kernel = functools.partial(
        _disteuc_kernel,
        gamma=gamma,
        gamma_bias=gamma * float(combination_bias),
        c_total=C, c_block=TC)

    out = pl.pallas_call(
        kernel,
        out_shape=jax.ShapeDtypeStruct((N, Hf, Wf), out_dtype),
        grid=grid,
        in_specs=[
            pl.BlockSpec((1, TC, TH, TW), lambda n, i, j, kc: (n, kc, i, j)),
            pl.BlockSpec((1, TC, TH, TW), lambda n, i, j, kc: (n, kc, i, j)),
        ],
        out_specs=pl.BlockSpec((1, TH, TW), lambda n, i, j, kc: (n, i, j)),
        scratch_shapes=[pltpu.VMEM((TH, TW), jnp.float32)],
        compiler_params=pltpu.CompilerParams(
            dimension_semantics=("parallel", "parallel", "parallel", "arbitrary"),
            vmem_limit_bytes=vmem_limit),
    )(refp, tarp)

    if k > 1:
        out = out.reshape(N, H, W)
    return out


def _reference(ref_tensor, tar_tensor, bias, gamma):
    d = (tar_tensor.astype(jnp.float32) - ref_tensor.astype(jnp.float32)) ** 2
    dist = jnp.sqrt(d.sum(axis=1))
    return jax.nn.sigmoid(gamma * (dist + bias))


if __name__ == "__main__":
    # Deterministic parameter init (matches nn.Parameter(torch.tensor(-2.15))).
    combination_bias = -2.15
    gamma_sigmoid = 10

    key = jax.random.PRNGKey(0)
    keys = jax.random.split(key, 6)

    # 1) Natural small shapes (exercises the narrow-W lane fold).
    N, C, H, W = 2, 4, 16, 16
    ref1 = jax.random.normal(keys[0], (N, C, H, W), dtype=jnp.float32)
    tar1 = jax.random.normal(keys[1], (N, C, H, W), dtype=jnp.float32)
    out1 = jax.block_until_ready(
        dist_euc_forward(ref1, tar1, combination_bias, gamma_sigmoid))
    exp1 = _reference(ref1, tar1, combination_bias, gamma_sigmoid)
    assert out1.shape == (N, H, W)
    assert jnp.allclose(out1, exp1, atol=1e-5, rtol=1e-5)

    # 2) Odd spatial dims, N=1 (exercises the megacore H-split + edge blocks,
    #    with no padding round trip).
    ref2 = jax.random.normal(keys[2], (1, 3, 20, 200), dtype=jnp.float32)
    tar2 = jax.random.normal(keys[3], (1, 3, 20, 200), dtype=jnp.float32)
    out2 = jax.block_until_ready(
        dist_euc_forward(ref2, tar2, combination_bias, gamma_sigmoid))
    exp2 = _reference(ref2, tar2, combination_bias, gamma_sigmoid)
    assert out2.shape == (1, 20, 200)
    assert jnp.allclose(out2, exp2, atol=1e-5, rtol=1e-5)

    # 3) Tiny artificial block budget: forces spatial tiling, edge blocks on W,
    #    and the channel-chunked ("arbitrary" axis + f32 accumulator) path.
    ref3 = jax.random.normal(keys[4], (1, 5, 24, 260), dtype=jnp.float32)
    tar3 = jax.random.normal(keys[5], (1, 5, 24, 260), dtype=jnp.float32)
    out3 = jax.block_until_ready(
        dist_euc_forward(ref3, tar3, combination_bias, gamma_sigmoid,
                         block_budget_bytes=64 * 1024))
    exp3 = _reference(ref3, tar3, combination_bias, gamma_sigmoid)
    assert out3.shape == (1, 24, 260)
    assert jnp.allclose(out3, exp3, atol=1e-5, rtol=1e-5)

    print("KERNEL_OK")
</pallas_src>

<mosaic_0001>
module attributes {stable_mosaic.version = 11 : i64} {
  func.func @_disteuc_kernel(%arg0: i32, %arg1: i32, %arg2: i32, %arg3: i32, %arg4: memref<1x4x2x128xf32, #tpu.memory_space<vmem>>, %arg5: memref<1x4x2x128xf32, #tpu.memory_space<vmem>>, %arg6: memref<1x2x128xf32, #tpu.memory_space<vmem>>, %arg7: memref<2x128xf32, #tpu.memory_space<vmem>>) attributes {dimension_semantics = [#tpu.dimension_semantics<parallel>, #tpu.dimension_semantics<parallel>, #tpu.dimension_semantics<parallel>, #tpu.dimension_semantics<arbitrary>], iteration_bounds = array<i64: 2, 1, 1, 1>, scalar_prefetch = 0 : i64, scratch_operands = 1 : i64, tpu.core_type = #tpu.core_type<tc>, window_params = [{transform_indices = @transform_0, window_bounds = array<i64: 1, 4, 2, 128>}, {transform_indices = @transform_1, window_bounds = array<i64: 1, 4, 2, 128>}, {transform_indices = @transform_2, window_bounds = array<i64: 1, 2, 128>}]} {
    %c0_i32 = arith.constant 0 : i32
    %0 = arith.cmpi eq, %arg3, %c0_i32 : i32
    %1 = arith.extui %0 : i1 to i32
    %c0_i32_0 = arith.constant 0 : i32
    %2 = arith.cmpi ne, %1, %c0_i32_0 : i32
    scf.if %2 {
      %cst = arith.constant 0.000000e+00 : f32
      %36 = vector.broadcast %cst : f32 to vector<2x128xf32>
      %c0_35 = arith.constant 0 : index
      %c0_36 = arith.constant 0 : index
      %37 = vector.load %arg7[%c0_35, %c0_36] : memref<2x128xf32, #tpu.memory_space<vmem>>, vector<2x128xf32>
      tpu.vector_store %arg7[%c0_35, %c0_36], %36 {strides = array<i32>} : memref<2x128xf32, #tpu.memory_space<vmem>>, vector<2x128xf32>,
    } else {
    }
    %c0 = arith.constant 0 : index
    %c0_1 = arith.constant 0 : index
    %3 = vector.load %arg7[%c0, %c0_1] : memref<2x128xf32, #tpu.memory_space<vmem>>, vector<2x128xf32>
    %c0_2 = arith.constant 0 : index
    %c0_3 = arith.constant 0 : index
    %c0_4 = arith.constant 0 : index
    %c0_5 = arith.constant 0 : index
    %4 = vector.load %arg5[%c0_2, %c0_3, %c0_4, %c0_5] : memref<1x4x2x128xf32, #tpu.memory_space<vmem>>, vector<1x1x2x128xf32>
    %5 = vector.shape_cast %4 : vector<1x1x2x128xf32> to vector<2x128xf32>
    %c0_6 = arith.constant 0 : index
    %c0_7 = arith.constant 0 : index
    %c0_8 = arith.constant 0 : index
    %c0_9 = arith.constant 0 : index
    %6 = vector.load %arg4[%c0_6, %c0_7, %c0_8, %c0_9] : memref<1x4x2x128xf32, #tpu.memory_space<vmem>>, vector<1x1x2x128xf32>
    %7 = vector.shape_cast %6 : vector<1x1x2x128xf32> to vector<2x128xf32>
    %8 = arith.subf %5, %7 : vector<2x128xf32>
    %9 = arith.mulf %8, %8 : vector<2x128xf32>
    %10 = arith.addf %3, %9 : vector<2x128xf32>
    %c0_10 = arith.constant 0 : index
    %c1 = arith.constant 1 : index
    %c0_11 = arith.constant 0 : index
    %c0_12 = arith.constant 0 : index
    %11 = vector.load %arg5[%c0_10, %c1, %c0_11, %c0_12] : memref<1x4x2x128xf32, #tpu.memory_space<vmem>>, vector<1x1x2x128xf32>
    %12 = vector.shape_cast %11 : vector<1x1x2x128xf32> to vector<2x128xf32>
    %c0_13 = arith.constant 0 : index
    %c1_14 = arith.constant 1 : index
    %c0_15 = arith.constant 0 : index
    %c0_16 = arith.constant 0 : index
    %13 = vector.load %arg4[%c0_13, %c1_14, %c0_15, %c0_16] : memref<1x4x2x128xf32, #tpu.memory_space<vmem>>, vector<1x1x2x128xf32>
    %14 = vector.shape_cast %13 : vector<1x1x2x128xf32> to vector<2x128xf32>
    %15 = arith.subf %12, %14 : vector<2x128xf32>
    %16 = arith.mulf %15, %15 : vector<2x128xf32>
    %17 = arith.addf %10, %16 : vector<2x128xf32>
    %c0_17 = arith.constant 0 : index
    %c2 = arith.constant 2 : index
    %c0_18 = arith.constant 0 : index
    %c0_19 = arith.constant 0 : index
    %18 = vector.load %arg5[%c0_17, %c2, %c0_18, %c0_19] : memref<1x4x2x128xf32, #tpu.memory_space<vmem>>, vector<1x1x2x128xf32>
    %19 = vector.shape_cast %18 : vector<1x1x2x128xf32> to vector<2x128xf32>
    %c0_20 = arith.constant 0 : index
    %c2_21 = arith.constant 2 : index
    %c0_22 = arith.constant 0 : index
    %c0_23 = arith.constant 0 : index
    %20 = vector.load %arg4[%c0_20, %c2_21, %c0_22, %c0_23] : memref<1x4x2x128xf32, #tpu.memory_space<vmem>>, vector<1x1x2x128xf32>
    %21 = vector.shape_cast %20 : vector<1x1x2x128xf32> to vector<2x128xf32>
    %22 = arith.subf %19, %21 : vector<2x128xf32>
    %23 = arith.mulf %22, %22 : vector<2x128xf32>
    %24 = arith.addf %17, %23 : vector<2x128xf32>
    %c0_24 = arith.constant 0 : index
    %c3 = arith.constant 3 : index
    %c0_25 = arith.constant 0 : index
    %c0_26 = arith.constant 0 : index
    %25 = vector.load %arg5[%c0_24, %c3, %c0_25, %c0_26] : memref<1x4x2x128xf32, #tpu.memory_space<vmem>>, vector<1x1x2x128xf32>
    %26 = vector.shape_cast %25 : vector<1x1x2x128xf32> to vector<2x128xf32>
    %c0_27 = arith.constant 0 : index
    %c3_28 = arith.constant 3 : index
    %c0_29 = arith.constant 0 : index
    %c0_30 = arith.constant 0 : index
    %27 = vector.load %arg4[%c0_27, %c3_28, %c0_29, %c0_30] : memref<1x4x2x128xf32, #tpu.memory_space<vmem>>, vector<1x1x2x128xf32>
    %28 = vector.shape_cast %27 : vector<1x1x2x128xf32> to vector<2x128xf32>
    %29 = arith.subf %26, %28 : vector<2x128xf32>
    %30 = arith.mulf %29, %29 : vector<2x128xf32>
    %31 = arith.addf %24, %30 : vector<2x128xf32>
    %c0_31 = arith.constant 0 : index
    %c0_32 = arith.constant 0 : index
    %32 = vector.load %arg7[%c0_31, %c0_32] : memref<2x128xf32, #tpu.memory_space<vmem>>, vector<2x128xf32>
    tpu.vector_store %arg7[%c0_31, %c0_32], %31 {strides = array<i32>} : memref<2x128xf32, #tpu.memory_space<vmem>>, vector<2x128xf32>,
    %c0_i32_33 = arith.constant 0 : i32
    %33 = arith.cmpi eq, %arg3, %c0_i32_33 : i32
    %34 = arith.extui %33 : i1 to i32
    %c0_i32_34 = arith.constant 0 : i32
    %35 = arith.cmpi ne, %34, %c0_i32_34 : i32
    scf.if %35 {
      %c0_35 = arith.constant 0 : index
      %c0_36 = arith.constant 0 : index
      %36 = vector.load %arg7[%c0_35, %c0_36] : memref<2x128xf32, #tpu.memory_space<vmem>>, vector<2x128xf32>
      %37 = math.sqrt %36 : vector<2x128xf32>
      %cst = arith.constant 1.000000e+01 : f32
      %38 = vector.broadcast %cst : f32 to vector<2x128xf32>
      %39 = arith.mulf %38, %37 : vector<2x128xf32>
      %cst_37 = arith.constant -2.150000e+01 : f32
      %40 = vector.broadcast %cst_37 : f32 to vector<2x128xf32>
      %41 = arith.addf %39, %40 : vector<2x128xf32>
      %42 = arith.negf %41 : vector<2x128xf32>
      %43 = math.exp %42 : vector<2x128xf32>
      %cst_38 = arith.constant 1.000000e+00 : f32
      %44 = vector.broadcast %cst_38 : f32 to vector<2x128xf32>
      %45 = arith.addf %44, %43 : vector<2x128xf32>
      %46 = arith.divf %44, %45 : vector<2x128xf32>
      %c0_39 = arith.constant 0 : index
      %c0_40 = arith.constant 0 : index
      %c0_41 = arith.constant 0 : index
      %47 = vector.load %arg6[%c0_39, %c0_40, %c0_41] : memref<1x2x128xf32, #tpu.memory_space<vmem>>, vector<1x2x128xf32>
      %48 = vector.shape_cast %47 : vector<1x2x128xf32> to vector<2x128xf32>
      %49 = vector.shape_cast %46 : vector<2x128xf32> to vector<1x2x128xf32>
      tpu.vector_store %arg6[%c0_39, %c0_40, %c0_41], %49 {strides = array<i32>} : memref<1x2x128xf32, #tpu.memory_space<vmem>>, vector<1x2x128xf32>,
    } else {
    }
    return
  }
  func.func @transform_0(%arg0: i32, %arg1: i32, %arg2: i32, %arg3: i32) -> (i32, i32, i32, i32) {
    %c0_i32 = arith.constant 0 : i32
    return %arg0, %arg3, %arg1, %arg2 : i32, i32, i32, i32
  }
  func.func @transform_1(%arg0: i32, %arg1: i32, %arg2: i32, %arg3: i32) -> (i32, i32, i32, i32) {
    %c0_i32 = arith.constant 0 : i32
    return %arg0, %arg3, %arg1, %arg2 : i32, i32, i32, i32
  }
  func.func @transform_2(%arg0: i32, %arg1: i32, %arg2: i32, %arg3: i32) -> (i32, i32, i32) {
    %c0_i32 = arith.constant 0 : i32
    return %arg0, %arg1, %arg2 : i32, i32, i32
  }
}

</mosaic_0001>

<llo_original>
// kernel: tpu_custom_call.1
$region0: #{tpu_custom_call.1}
  #allocation0 [shape = 'u32[]', space=smem, size = 0x4, offset = 0x4, fixed_abs, tag = 'smem constant byte address 0x4 - core index']
  #allocation1 [shape = 'u32[144,128]{1,0:T(1,128)}', space=vmem, size = 0x12000, scoped, tag = 'internal scratch']
  #allocation2 [shape = 'f32[2,128]{1,0:T(2,128)}', space=vmem, size = 0x400, scoped, tag = 'scratch operand']
  %s0 = inlined_call_operand.hbm [shape: f32[2,4,2,128], index: 0, kind: input, shape index: {}]
  %s1 = inlined_call_operand.hbm [shape: f32[2,4,2,128], index: 1, kind: input, shape index: {}]
  %s2 = inlined_call_operand.hbm [shape: f32[2,2,128], index: 2, kind: output, shape index: {}]
  %s3 = sld [smem:[#allocation0]]
  $region57: #{tpu_custom_call.1} parent=0
    _
  %s5 = ssub.s32 1, %s3
  %s6 = scalar_select 0, %s5, %s3
  $region1: #{tpu_custom_call.1} parent=0
    #allocation3 [shape = 'u8[8192]{0}', space=vmem, size = 0x2000, scoped, tag = 'input window, operand 0']
    #allocation4 [shape = 's32[2]{0}', space=sflag, size = 0x8, scoped, tag = 'scoped memory for tpu_custom_call.1']
    #allocation5 [shape = 's32[2]{0}', space=sflag, size = 0x8, scoped, tag = 'scoped memory for tpu_custom_call.1']
    #allocation6 [shape = 'u8[8192]{0}', space=vmem, size = 0x2000, scoped, tag = 'input window, operand 1']
    #allocation7 [shape = 's32[2]{0}', space=sflag, size = 0x8, scoped, tag = 'scoped memory for tpu_custom_call.1']
    #allocation8 [shape = 'u8[2048]{0}', space=vmem, size = 0x800, scoped, tag = 'output window, operand 0']
    %7 = vsyncpa [#allocation4], 0
    %s8 = scalar_lea.sflag [#allocation4], 1
    %9 = vsyncpa %s8, 0
    %10 = vsyncpa [#allocation7], 0
    %s11 = scalar_lea.sflag [#allocation7], 1
    %12 = vsyncpa %s11, 0
    %13 = vsyncpa [#allocation5], 0
    %s14 = scalar_lea.sflag [#allocation5], 1
    %15 = vsyncpa %s14, 0
    loop: start=0, step=1, limit=4
    $region2: #{tpu_custom_call.1} parent=1 // loop_pre_header
      _
    $region3: #{tpu_custom_call.1} parent=1 // loop_header
      %s17 = sphi 0, %s21
      %p18 = scmp.ge.s32.totalorder %s17, 4
      %s24 = sphi 0, %s50
      %s25 = sphi 0, %s46
      %s26 = sphi 0, %s42
      %s27 = sphi 0, %s38
      %s28 = sphi 0, %s24
      %s29 = sphi 0, %s25
      %s30 = sphi 0, %s26
      %s31 = sphi 0, %s27
      %s32 = sphi 0, %s28
      %s33 = sphi 0, %s29
      %s34 = sphi 0, %s30
      %s35 = sphi 0, %s31
      %s59 = sphi 0, %s61
      %s62 = sphi 0, %s59
      %s63 = sphi 0, %s62
      %s79 = sphi 0, %s63
      %s91 = sphi 0, %s93
      %s94 = sphi 0, %s91
      %s95 = sphi 0, %s94
      %s111 = sphi 0, %s95
      %s121 = sphi 0, %s123
      %s124 = sphi 0, %s121
      %s125 = sphi 0, %s124
      %s141 = sphi 0, %s125
    $region4: #{tpu_custom_call.1} parent=1 // loop_header_branch
      %20 = sbr.rel (%p18) target = $region8
    $region5: #{tpu_custom_call.1} parent=1 // loop_body
      %s22 = ssub.s32 %s17, 1
      %s23 = ssub.s32 %s17, 2
      %s36 = sadd.s32 1, %s27
      %p37 = scmp.ge.s32.totalorder %s36, 1
      %s38 = scalar_select %p37, 0, %s36
      %s39 = sadd.s32 1, %s26
      %s40 = scalar_select %p37, %s39, %s26
      %p41 = scmp.ge.s32.totalorder %s40, 1
      %s42 = scalar_select %p41, 0, %s40
      %s43 = sadd.s32 1, %s25
      %s44 = scalar_select %p41, %s43, %s25
      %p45 = scmp.ge.s32.totalorder %s44, 1
      %s46 = scalar_select %p45, 0, %s44
      %s47 = sadd.s32 1, %s24
      %s48 = scalar_select %p45, %s47, %s24
      %p49 = scmp.ge.s32.totalorder %s48, 2
      %s50 = scalar_select %p49, 0, %s48
      %s51 = ssub.s32 %s24, %s50
      %s52 = ssub.s32 %s27, %s38
      %s53 = sor.u32 %s51, %s52
      %s54 = ssub.s32 %s25, %s46
      %s55 = sor.u32 %s53, %s54
      %s56 = ssub.s32 %s26, %s42
      %s57 = sor.u32 %s55, %s56
      %p58 = scmp.eq.s32.totalorder %s57, 0
      %s60 = sadd.s32 %s59, 1
      %s61 = scalar_select %p58, %s59, %s60
      %p64 = pneg %p58
      %p65 = scmp.eq.s32.totalorder %s17, 1
      %p66 = por %p64, %p65
      %p67 = scmp.ne.s32.totalorder %s59, %s62
      %p68 = scmp.eq.s32.totalorder %s17, 0
      %p69 = por %p67, %p68
      %p70 = scmp.ne.s32.totalorder %s59, %s62
      %p71 = scmp.eq.s32.totalorder %s22, 1
      %p72 = por %p70, %p71
      %p73 = scmp.ne.s32.totalorder %s62, %s63
      %p74 = scmp.eq.s32.totalorder %s22, 0
      %p75 = por %p73, %p74
      %p76 = scmp.ne.s32.totalorder %s62, %s63
      %p77 = scmp.eq.s32.totalorder %s23, 1
      %p78 = por %p76, %p77
      %p80 = scmp.ne.s32.totalorder %s63, %s79
      %p81 = scmp.eq.s32.totalorder %s23, 0
      %p82 = por %p80, %p81
      %s83 = ssub.s32 %s24, %s50
      %s84 = ssub.s32 %s27, %s38
      %s85 = sor.u32 %s83, %s84
      %s86 = ssub.s32 %s25, %s46
      %s87 = sor.u32 %s85, %s86
      %s88 = ssub.s32 %s26, %s42
      %s89 = sor.u32 %s87, %s88
      %p90 = scmp.eq.s32.totalorder %s89, 0
      %s92 = sadd.s32 %s91, 1
      %s93 = scalar_select %p90, %s91, %s92
      %p96 = pneg %p90
      %p97 = scmp.eq.s32.totalorder %s17, 1
      %p98 = por %p96, %p97
      %p99 = scmp.ne.s32.totalorder %s91, %s94
      %p100 = scmp.eq.s32.totalorder %s17, 0
      %p101 = por %p99, %p100
      %p102 = scmp.ne.s32.totalorder %s91, %s94
      %p103 = scmp.eq.s32.totalorder %s22, 1
      %p104 = por %p102, %p103
      %p105 = scmp.ne.s32.totalorder %s94, %s95
      %p106 = scmp.eq.s32.totalorder %s22, 0
      %p107 = por %p105, %p106
      %p108 = scmp.ne.s32.totalorder %s94, %s95
      %p109 = scmp.eq.s32.totalorder %s23, 1
      %p110 = por %p108, %p109
      %p112 = scmp.ne.s32.totalorder %s95, %s111
      %p113 = scmp.eq.s32.totalorder %s23, 0
      %p114 = por %p112, %p113
      %s115 = ssub.s32 %s24, %s50
      %s116 = ssub.s32 %s25, %s46
      %s117 = sor.u32 %s115, %s116
      %s118 = ssub.s32 %s26, %s42
      %s119 = sor.u32 %s117, %s118
      %p120 = scmp.eq.s32.totalorder %s119, 0
      %s122 = sadd.s32 %s121, 1
      %s123 = scalar_select %p120, %s121, %s122
      %p126 = pneg %p120
      %p127 = scmp.eq.s32.totalorder %s17, 1
      %p128 = por %p126, %p127
      %p129 = scmp.ne.s32.totalorder %s121, %s124
      %p130 = scmp.eq.s32.totalorder %s17, 0
      %p131 = por %p129, %p130
      %p132 = scmp.ne.s32.totalorder %s121, %s124
      %p133 = scmp.eq.s32.totalorder %s22, 1
      %p134 = por %p132, %p133
      %p135 = scmp.ne.s32.totalorder %s124, %s125
      %p136 = scmp.eq.s32.totalorder %s22, 0
      %p137 = por %p135, %p136
      %p138 = scmp.ne.s32.totalorder %s124, %s125
      %p139 = scmp.eq.s32.totalorder %s23, 1
      %p140 = por %p138, %p139
      %p142 = scmp.ne.s32.totalorder %s125, %s141
      %p143 = scmp.eq.s32.totalorder %s23, 0
      %p144 = por %p142, %p143
      %p145 = scmp.le.s32.totalorder 1, %s17
      %p146 = scmp.lt.s32.totalorder %s17, 3
      %p147 = pnand %p145, %p146
      %p148 = pneg %p147
      // Predicated region
      $region9: #{tpu_custom_call.1} parent=5 // pred_check
        _
      $region10: #{tpu_custom_call.1} parent=5 // pred_check_branch
        %150 = sbr.rel (%p147) target = $region12
      $region11: #{tpu_custom_call.1} parent=5 // pred_region
        %s151 = ssub.s32 %s17, 1
      $region12: #{tpu_custom_call.1} parent=5 // pred_fallthru
        _
      %p152 = scmp.lt.s32.totalorder %s17, 2
      // Predicated region
      $region13: #{tpu_custom_call.1} parent=5 // pred_check
        %p153 = pneg %p152
      $region14: #{tpu_custom_call.1} parent=5 // pred_check_branch
        %155 = sbr.rel (%p153) target = $region16
      $region15: #{tpu_custom_call.1} parent=5 // pred_region
        // Predicated region
        $region17: #{tpu_custom_call.1} parent=15 // pred_check
          %p156 = pneg %p69
        $region18: #{tpu_custom_call.1} parent=15 // pred_check_branch
          %158 = sbr.rel (%p156) target = $region20
        $region19: #{tpu_custom_call.1} parent=15 // pred_region
          %s159 = sand.u32 %s59, 1
          %s160 = scalar_lea.sflag [#allocation4], %s159
          %s161 = sand.u32 %s59, 1
          %s162 = smul.addr %s161, 8
          %s163 = scalar_lea.vmem [#allocation3], %s162
          %s164 = smul.u32 4, %s27
          %s166 = ssub.s32 128, 128
          %167 = vsyncadd %s160, %s166
          %s168 = sadd.s32 %s26, %s25
          %s169 = sadd.s32 %s168, %s164
          %s170 = smul.addr %s24, 4
          %s171 = sadd.s32 %s169, %s170
          %s172 = smul.addr %s171, 32
          %s173 = scalar_lea.hbm %s0, %s172
          %s174 = sshll.u32 %s163, 4
          %s175 = int_to_ptr.vmem [resolvable:$true] %s174
          %180 = dma.hbm_to_vmem [thread:$0]  %s173, 128, %s175, %s160, 32, 32, 2
        $region20: #{tpu_custom_call.1} parent=15 // pred_fallthru
          _
        // Predicated region
        $region21: #{tpu_custom_call.1} parent=15 // pred_check
          %p181 = pneg %p101
        $region22: #{tpu_custom_call.1} parent=15 // pred_check_branch
          %183 = sbr.rel (%p181) target = $region24
        $region23: #{tpu_custom_call.1} parent=15 // pred_region
          %s184 = sand.u32 %s91, 1
          %s185 = scalar_lea.sflag [#allocation7], %s184
          %s186 = sand.u32 %s91, 1
          %s187 = smul.addr %s186, 8
          %s188 = scalar_lea.vmem [#allocation6], %s187
          %s189 = smul.u32 4, %s27
          %s191 = ssub.s32 128, 128
          %192 = vsyncadd %s185, %s191
          %s193 = sadd.s32 %s26, %s25
          %s194 = sadd.s32 %s193, %s189
          %s195 = smul.addr %s24, 4
          %s196 = sadd.s32 %s194, %s195
          %s197 = smul.addr %s196, 32
          %s198 = scalar_lea.hbm %s1, %s197
          %s199 = sshll.u32 %s188, 4
          %s200 = int_to_ptr.vmem [resolvable:$true] %s199
          %205 = dma.hbm_to_vmem [thread:$0]  %s198, 128, %s200, %s185, 32, 32, 2
        $region24: #{tpu_custom_call.1} parent=15 // pred_fallthru
          _
      $region16: #{tpu_custom_call.1} parent=5 // pred_fallthru
        _
      %p206 = scmp.le.s32.totalorder 1, %s17
      %p207 = scmp.lt.s32.totalorder %s17, 3
      %p208 = pnand %p206, %p207
      %p209 = pneg %p208
      // Predicated region
      $region25: #{tpu_custom_call.1} parent=5 // pred_check
        _
      $region26: #{tpu_custom_call.1} parent=5 // pred_check_branch
        %211 = sbr.rel (%p208) target = $region28
      $region27: #{tpu_custom_call.1} parent=5 // pred_region
        %s212 = ssub.s32 %s17, 1
        %s213 = sand.u32 %s62, 1
        %s214 = scalar_lea.sflag [#allocation4], %s213
        %s215 = sand.u32 %s62, 1
        %s216 = smul.addr %s215, 8
        %s217 = scalar_lea.vmem [#allocation3], %s216
        // Predicated region
        $region29: #{tpu_custom_call.1} parent=27 // pred_check
          %p218 = pneg %p75
        $region30: #{tpu_custom_call.1} parent=27 // pred_check_branch
          %220 = sbr.rel (%p218) target = $region32
        $region31: #{tpu_custom_call.1} parent=27 // pred_region
          %221 = dma.done %s214, 128
        $region32: #{tpu_custom_call.1} parent=27 // pred_fallthru
          _
        %s222 = sand.u32 %s94, 1
        %s223 = scalar_lea.sflag [#allocation7], %s222
        %s224 = sand.u32 %s94, 1
        %s225 = smul.addr %s224, 8
        %s226 = scalar_lea.vmem [#allocation6], %s225
        // Predicated region
        $region33: #{tpu_custom_call.1} parent=27 // pred_check
          %p227 = pneg %p107
        $region34: #{tpu_custom_call.1} parent=27 // pred_check_branch
          %229 = sbr.rel (%p227) target = $region36
        $region35: #{tpu_custom_call.1} parent=27 // pred_region
          %230 = dma.done %s223, 128
        $region36: #{tpu_custom_call.1} parent=27 // pred_fallthru
          _
        %s231 = sand.u32 %s62, 1
        %s232 = scalar_lea.sflag [#allocation4], %s231
        %s233 = sand.u32 %s62, 1
        %s234 = smul.addr %s233, 8
        %s235 = scalar_lea.vmem [#allocation3], %s234
        %p236 = pneg %p75
        %p237 = pneg %p72
        %s238 = sand.u32 %s94, 1
        %s239 = scalar_lea.sflag [#allocation7], %s238
        %s240 = sand.u32 %s94, 1
        %s241 = smul.addr %s240, 8
        %s242 = scalar_lea.vmem [#allocation6], %s241
        %p243 = pneg %p107
        %p244 = pneg %p104
        %p245 = pneg %p137
        %p246 = pneg %p134
        %s247 = sand.u32 %s124, 1
        %s248 = scalar_lea.sflag [#allocation5], %s247
        %s249 = sand.u32 %s124, 1
        %s250 = smul.addr %s249, 2
        %s251 = scalar_lea.vmem [#allocation8], %s250
        %s252 = smul.u32 4, %s31
        %s253 = smul.u32 4, %s31
        %p254 = scmp.eq.s32.totalorder %s31, 0
        // Predicated region
        $region37: #{tpu_custom_call.1} parent=27 // pred_check
          %p255 = pneg %p254
        $region38: #{tpu_custom_call.1} parent=27 // pred_check_branch
          %257 = sbr.rel (%p255) target = $region40
        $region39: #{tpu_custom_call.1} parent=27 // pred_region
          %258 = vst [vmem:[#allocation2] sm:$0x3] 0.0
        $region40: #{tpu_custom_call.1} parent=27 // pred_fallthru
          _
        %v259 = vld [vmem:[#allocation2] sm:$0x3]
        %v260 = vld [vmem:[%s226] sm:$0x3]
        %v261 = vld [vmem:[%s217] sm:$0x3]
        %v262 = vsub.f32 %v260, %v261
        %v263 = vmul.f32 %v262, %v262
        %v264 = vadd.f32 %v259, %v263
        %s265 = scalar_lea.vmem %s226, 2 [#allocation6]
        %v266 = vld [vmem:[%s265] sm:$0x3]
        %s267 = scalar_lea.vmem %s217, 2 [#allocation3]
        %v268 = vld [vmem:[%s267] sm:$0x3]
        %v269 = vsub.f32 %v266, %v268
        %v270 = vmul.f32 %v269, %v269
        %v271 = vadd.f32 %v264, %v270
        %s272 = scalar_lea.vmem %s226, 4 [#allocation6]
        %v273 = vld [vmem:[%s272] sm:$0x3]
        %s274 = scalar_lea.vmem %s217, 4 [#allocation3]
        %v275 = vld [vmem:[%s274] sm:$0x3]
        %v276 = vsub.f32 %v273, %v275
        %v277 = vmul.f32 %v276, %v276
        %v278 = vadd.f32 %v271, %v277
        %s279 = scalar_lea.vmem %s226, 6 [#allocation6]
        %v280 = vld [vmem:[%s279] sm:$0x3]
        %s281 = scalar_lea.vmem %s217, 6 [#allocation3]
        %v282 = vld [vmem:[%s281] sm:$0x3]
        %v283 = vsub.f32 %v280, %v282
        %v284 = vmul.f32 %v283, %v283
        %v285 = vadd.f32 %v278, %v284
        %286 = vst [vmem:[#allocation2] sm:$0x3] %v285
        // Predicated region
        $region41: #{tpu_custom_call.1} parent=27 // pred_check
          %p287 = pneg %p254
        $region42: #{tpu_custom_call.1} parent=27 // pred_check_branch
          %289 = sbr.rel (%p287) target = $region44
        $region43: #{tpu_custom_call.1} parent=27 // pred_region
          %v290 = vld [vmem:[#allocation2] sm:$0x3]
          %v291 = vrsqrt.pop %v290
          %v292 = vmul.f32 %v290, %v291
          %vm293 = vcmp.eq.f32.partialorder %v290, inf
          %v294 = vsel %vm293, %v290, %v292
          %vm295 = vcmp.eq.f32.partialorder %v290, 0.0
          %v296 = vand.u32 %v290, 2147483648
          %v297 = vsel %vm295, %v296, %v294
          %v298 = vmul.f32 %v297, 10.0
          %v299 = vadd.f32 %v298, -21.5
          %v300 = vxor.u32 %v299, 2147483648
          %v301 = vmul.f32 %v300, 1.442695
          %v302 = vpow.pop %v301
          %v303 = vadd.f32 %v302, 1.0
          %v304 = vrcp.pop %v303
          %v305 = vmul.f32 1.0, %v304
          %306 = vst [vmem:[%s251] sm:$0x3] %v305
        $region44: #{tpu_custom_call.1} parent=27 // pred_fallthru
          _
        %s307 = sand.u32 %s124, 1
        %s308 = scalar_lea.sflag [#allocation5], %s307
        %s309 = sand.u32 %s124, 1
        %s310 = smul.addr %s309, 2
        %s311 = scalar_lea.vmem [#allocation8], %s310
        // Predicated region
        $region45: #{tpu_custom_call.1} parent=27 // pred_check
          %p312 = pneg %p134
        $region46: #{tpu_custom_call.1} parent=27 // pred_check_branch
          %314 = sbr.rel (%p312) target = $region48
        $region47: #{tpu_custom_call.1} parent=27 // pred_region
          %s316 = ssub.s32 32, 32
          %317 = vsyncadd %s308, %s316
          %s318 = sadd.s32 %s30, %s29
          %s319 = sadd.s32 %s318, %s28
          %s320 = smul.addr %s319, 32
          %s321 = scalar_lea.hbm %s2, %s320
          %s323 = sshll.u32 %s311, 4
          %s324 = int_to_ptr.vmem [resolvable:$true] %s323
          %326 = dma.vmem_to_hbm [thread:$0]  %s324, 32, %s321, %s308
        $region48: #{tpu_custom_call.1} parent=27 // pred_fallthru
          _
      $region28: #{tpu_custom_call.1} parent=5 // pred_fallthru
        _
      %p327 = scmp.le.s32.totalorder 2, %s17
      // Predicated region
      $region49: #{tpu_custom_call.1} parent=5 // pred_check
        %p328 = pneg %p327
      $region50: #{tpu_custom_call.1} parent=5 // pred_check_branch
        %330 = sbr.rel (%p328) target = $region52
      $region51: #{tpu_custom_call.1} parent=5 // pred_region
        %s331 = ssub.s32 %s17, 2
        // Predicated region
        $region53: #{tpu_custom_call.1} parent=51 // pred_check
          %p332 = pneg %p140
        $region54: #{tpu_custom_call.1} parent=51 // pred_check_branch
          %334 = sbr.rel (%p332) target = $region56
        $region55: #{tpu_custom_call.1} parent=51 // pred_region
          %s335 = sand.u32 %s125, 1
          %s336 = scalar_lea.sflag [#allocation5], %s335
          %s337 = sand.u32 %s125, 1
          %s338 = smul.addr %s337, 2
          %s339 = scalar_lea.vmem [#allocation8], %s338
          %340 = dma.done %s336, 32
        $region56: #{tpu_custom_call.1} parent=51 // pred_fallthru
          _
      $region52: #{tpu_custom_call.1} parent=5 // pred_fallthru
        _
    $region6: #{tpu_custom_call.1} parent=1 // loop_footer
      %s21 = sadd.s32 1, %s17
    $region7: #{tpu_custom_call.1} parent=1 // loop_footer_branch
      %16 = sbr.rel target = $region3
    $region8: #{tpu_custom_call.1} parent=1 // loop_exit
      _
    %341 = vsyncpa [#allocation4], 1
    %s342 = scalar_lea.sflag [#allocation4], 1
    %343 = vsyncpa %s342, 1
    %344 = vsyncpa [#allocation7], 1
    %s345 = scalar_lea.sflag [#allocation7], 1
    %346 = vsyncpa %s345, 1
    %347 = vsyncpa [#allocation5], 1
    %s348 = scalar_lea.sflag [#allocation5], 1
    %349 = vsyncpa %s348, 1

</llo_original>
